<compile_context>
chip_gen: v7x
topology: tpu7x:2x2x1
jax: 0.10.0
libtpu: 0.0.40
codegen_flags: <defaults>
</compile_context>

<pallas_src>
import functools

import jax
import jax.numpy as jnp
from jax.experimental import pallas as pl
from jax.experimental.pallas import tpu as pltpu

HIT_FEATURES = 32        # hit node feature dimension
INSTANCE_FEATURES = 8    # object-condensation coordinate dimension
N_HITS = 256             # number of hit nodes in the example graph
MAX_INSTANCES = 4        # max true instances in the synthetic labels

LANE = 128               # lane-dense output width
PACK = 8                 # hits packed per 128-lane output row
GROUP = LANE // PACK     # 16 output lanes per hit: [beta, coords..., pad]
MAX_TILE_R = 256         # packed rows per grid step (= 2048 hits per tile)


# ----------------------------------------------------------------------------
# Pallas kernel: one bf16 MXU matmul + f32 bias add, lane-dense packed output.
# ----------------------------------------------------------------------------
def _instance_kernel(xp_ref, w_ref, b_ref, out_ref):
    # xp: [tile_r, PACK*F] f32   w: [PACK*F, 128] bf16   b: [1, 128] f32
    # out: [tile_r, 128] f32  (fully lane-dense -> unmasked vst)
    x = xp_ref[...].astype(jnp.bfloat16)          # in-kernel cast, hidden under DMA
    out_ref[...] = (
        jnp.dot(x, w_ref[...], preferred_element_type=jnp.float32) + b_ref[...])


def _pick_tile_r(r):
    """Packed-row tile size: big tiles, but >=2 grid steps when possible (v7x)."""
    if r <= 8:
        return r                       # single full-extent tile
    tile = min(MAX_TILE_R, (r + 1) // 2)
    tile -= tile % 8                   # sublane granularity
    return max(tile, 8)


def _instance_heads_pallas(x_packed, w_fused, b_fused):
    r, kf = x_packed.shape
    tile_r = _pick_tile_r(r)
    grid = (pl.cdiv(r, tile_r),)       # ragged last block handled by Pallas
    return pl.pallas_call(
        _instance_kernel,
        out_shape=jax.ShapeDtypeStruct((r, LANE), jnp.float32),
        grid=grid,
        in_specs=[
            pl.BlockSpec((tile_r, kf), lambda i: (i, 0)),   # packed hit rows
            pl.BlockSpec((kf, LANE), lambda i: (0, 0)),     # fused W (resident)
            pl.BlockSpec((1, LANE), lambda i: (0, 0)),      # fused bias (resident)
        ],
        out_specs=pl.BlockSpec((tile_r, LANE), lambda i: (i, 0)),
        compiler_params=pltpu.CompilerParams(
            dimension_semantics=("parallel",)),
    )(x_packed, w_fused, b_fused)


# ----------------------------------------------------------------------------
# instance_heads: Pallas forward + plain-JAX backward (custom_vjp).
# ----------------------------------------------------------------------------
def _heads_impl(x, wb, bb, wc, bc):
    n, f = x.shape
    i = wc.shape[1]
    assert 1 + i <= GROUP, "instance_features must fit in a 16-lane group"

    # Pad hit count up to a multiple of PACK (no-op when N % 8 == 0).
    n_pad = ((n + PACK - 1) // PACK) * PACK
    if n_pad != n:
        # TODO(synk): for production graphs pad N to a multiple of 8 upstream;
        # this jnp.pad is a full-array copy.
        x = jnp.pad(x, ((0, n_pad - n), (0, 0)))

    # Per-hit fused head: [beta | coords | zero pad] -> 16 lanes.
    w16 = jnp.concatenate(
        [wb, wc, jnp.zeros((f, GROUP - 1 - i), jnp.float32)], axis=1)
    b16 = jnp.concatenate(
        [bb, bc, jnp.zeros((1, GROUP - 1 - i), jnp.float32)], axis=1)
    # Block-diagonal fused weight packs 8 hits per lane-dense output row.
    w_fused = jnp.kron(jnp.eye(PACK, dtype=jnp.float32), w16).astype(jnp.bfloat16)
    b_fused = jnp.tile(b16, (1, PACK))

    # Free, contiguous reshape: 8 consecutive hits share one packed row.
    x_packed = x.reshape(n_pad // PACK, PACK * f)

    slab = _instance_heads_pallas(x_packed, w_fused, b_fused)   # [n_pad/8, 128]
    slab = slab.reshape(n_pad, GROUP)                           # free reshape
    of = jax.nn.sigmoid(slab[:n, 0])      # sigmoid on N elements, in XLA
    ox = slab[:n, 1:1 + i]                # coordinates [N, I]
    return of, ox


@jax.custom_vjp
def instance_heads(x, wb, bb, wc, bc):
    return _heads_impl(x, wb, bb, wc, bc)


def _heads_fwd(x, wb, bb, wc, bc):
    of, ox = _heads_impl(x, wb, bb, wc, bc)
    return (of, ox), (x, wb, wc, of)


def _heads_bwd(res, cts):
    # Backward in plain JAX (tiny shapes: F=32, I=8).
    x, wb, wc, of = res
    d_of, d_ox = cts
    d_logit = (d_of * of * (1.0 - of))[:, None]       # [N, 1]
    d_x = d_logit @ wb.T + d_ox @ wc.T                # [N, F]
    d_wb = x.T @ d_logit                              # [F, 1]
    d_bb = jnp.sum(d_logit, axis=0, keepdims=True)    # [1, 1]
    d_wc = x.T @ d_ox                                 # [F, I]
    d_bc = jnp.sum(d_ox, axis=0, keepdims=True)       # [1, I]
    return d_x, d_wb, d_bb, d_wc, d_bc


instance_heads.defvjp(_heads_fwd, _heads_bwd)


# ----------------------------------------------------------------------------
# Object condensation loss (plain JAX glue).
# TODO(synk): ObjCondensationLoss lives outside this module in nugraph; this
# is a standard Kieseler-style attractive/repulsive + beta-term loss.
# ----------------------------------------------------------------------------
def obj_condensation_loss(ox, beta, y, num_objects=MAX_INSTANCES,
                          q_min=0.5, s_b=1.0):
    obj_ids = jnp.arange(num_objects)
    member = (y[None, :] == obj_ids[:, None])                 # [K, N]
    has_obj = member.any(axis=1)                              # [K]
    beta_c = jnp.clip(beta, 0.0, 1.0 - 1e-4)
    q = jnp.square(jnp.arctanh(beta_c)) + q_min               # [N]
    beta_masked = jnp.where(member, beta[None, :], -jnp.inf)
    alpha = jnp.argmax(beta_masked, axis=1)                   # [K]
    x_alpha = ox[alpha]                                       # [K, I]
    q_alpha = q[alpha]                                        # [K]
    dist = jnp.sqrt(jnp.sum(jnp.square(ox[None, :, :] - x_alpha[:, None, :]),
                            axis=-1) + 1e-12)                 # [K, N]
    v_attr = jnp.square(dist) * q_alpha[:, None]
    v_rep = jnp.maximum(0.0, 1.0 - dist) * q_alpha[:, None]
    pot = jnp.where(member, v_attr, v_rep) * has_obj[:, None].astype(ox.dtype)
    l_v = jnp.mean(q * jnp.sum(pot, axis=0))
    noise = (y < 0)
    n_obj = jnp.maximum(jnp.sum(has_obj), 1)
    n_noise = jnp.maximum(jnp.sum(noise), 1)
    l_beta = (jnp.sum(jnp.where(has_obj, 1.0 - beta[alpha], 0.0)) / n_obj
              + s_b * jnp.sum(jnp.where(noise, beta, 0.0)) / n_noise)
    return l_v + l_beta


# ----------------------------------------------------------------------------
# InstanceDecoder forward
# ----------------------------------------------------------------------------
def init_params(key, hit_features=HIT_FEATURES,
                instance_features=INSTANCE_FEATURES):
    kb_w, kb_b, kc_w, kc_b = jax.random.split(key, 4)
    bound = 1.0 / jnp.sqrt(hit_features)
    return {
        "temp": jnp.float32(0.0),
        # linear weights stored transposed: [in, out]
        "wb": jax.random.uniform(kb_w, (hit_features, 1), jnp.float32,
                                 -bound, bound),
        "bb": jax.random.uniform(kb_b, (1, 1), jnp.float32, -bound, bound),
        "wc": jax.random.uniform(kc_w, (hit_features, instance_features),
                                 jnp.float32, -bound, bound),
        "bc": jax.random.uniform(kc_b, (1, instance_features), jnp.float32,
                                 -bound, bound),
    }


@functools.partial(jax.jit, static_argnames=("stage",))
def instance_decoder_forward(params, x, y_instance, stage=None):
    of, ox = instance_heads(x, params["wb"], params["bb"],
                            params["wc"], params["bc"])
    temp = params["temp"]
    w = jnp.exp(-temp)
    loss = w * obj_condensation_loss(ox, of, y_instance) + temp
    metrics = {}
    if stage:
        metrics[f"loss_instance/{stage}"] = loss
        # metric computed in plain XLA (kept out of the kernel)
        metrics[f"num_instances/{stage}"] = jnp.sum(of > 0.1).astype(jnp.float32)
    if stage == "train":
        metrics["temperature/instance"] = temp
    # TODO(synk): PyG Batch _slice_dict/_inc_dict bookkeeping, materialize()
    # clustering, and pandas/plotly event displays have no Pallas/JAX
    # equivalent and are omitted.
    return loss, metrics, of, ox


if __name__ == "__main__":
    key = jax.random.PRNGKey(0)
    k_param, k_x, k_y = jax.random.split(key, 3)

    params = init_params(k_param)
    x = jax.random.normal(k_x, (N_HITS, HIT_FEATURES), jnp.float32)
    # instance labels in [-1, MAX_INSTANCES), -1 == noise hit
    y_instance = jax.random.randint(k_y, (N_HITS,), -1, MAX_INSTANCES,
                                    dtype=jnp.int32)

    loss, metrics, of, ox = instance_decoder_forward(
        params, x, y_instance, stage="train")
    jax.block_until_ready((loss, of, ox))
    assert of.shape == (N_HITS,)
    assert ox.shape == (N_HITS, INSTANCE_FEATURES)
    assert bool(jnp.isfinite(loss))

    # Tight correctness check vs. a bf16-operand / f32-accumulate reference
    # (matches the kernel's MXU path up to f32 reassociation).
    xb = x.astype(jnp.bfloat16)
    of_ref_bf = jax.nn.sigmoid(
        jnp.dot(xb, params["wb"].astype(jnp.bfloat16),
                preferred_element_type=jnp.float32) + params["bb"])[:, 0]
    ox_ref_bf = (jnp.dot(xb, params["wc"].astype(jnp.bfloat16),
                         preferred_element_type=jnp.float32) + params["bc"])
    assert jnp.allclose(of, of_ref_bf, atol=2e-4)
    assert jnp.allclose(ox, ox_ref_bf, atol=2e-4)

    # Loose sanity check vs. the pure-f32 reference (bf16 MXU operands).
    of_ref = jax.nn.sigmoid(x @ params["wb"] + params["bb"])[:, 0]
    ox_ref = x @ params["wc"] + params["bc"]
    assert jnp.allclose(of, of_ref, atol=5e-2)
    assert jnp.allclose(ox, ox_ref, atol=5e-2)

    # gradients flow through the pallas_call via the custom_vjp
    def loss_fn(p):
        l, _, _, _ = instance_decoder_forward(p, x, y_instance, stage="train")
        return l

    grads = jax.grad(loss_fn)(params)
    jax.block_until_ready(grads)
    assert all(bool(jnp.all(jnp.isfinite(g)))
               for g in jax.tree_util.tree_leaves(grads))

    print("KERNEL_OK")
</pallas_src>

<mosaic_0001>
module attributes {stable_mosaic.version = 11 : i64} {
  func.func @_instance_kernel(%arg0: i32, %arg1: memref<16x256xf32, #tpu.memory_space<vmem>>, %arg2: memref<256x128xbf16, #tpu.memory_space<vmem>>, %arg3: memref<1x128xf32, #tpu.memory_space<vmem>>, %arg4: memref<16x128xf32, #tpu.memory_space<vmem>>) attributes {dimension_semantics = [#tpu.dimension_semantics<parallel>], iteration_bounds = array<i64: 2>, scalar_prefetch = 0 : i64, scratch_operands = 0 : i64, tpu.core_type = #tpu.core_type<tc>, window_params = [{transform_indices = @transform_0, window_bounds = array<i64: 16, 256>}, {pipeline_mode = #tpu.pipeline_mode<synchronous>, transform_indices = @transform_1, window_bounds = array<i64: 256, 128>}, {pipeline_mode = #tpu.pipeline_mode<synchronous>, transform_indices = @transform_2, window_bounds = array<i64: 1, 128>}, {transform_indices = @transform_3, window_bounds = array<i64: 16, 128>}]} {
    %c0 = arith.constant 0 : index
    %c0_0 = arith.constant 0 : index
    %0 = vector.load %arg1[%c0, %c0_0] : memref<16x256xf32, #tpu.memory_space<vmem>>, vector<16x256xf32>
    %1 = arith.truncf %0 : vector<16x256xf32> to vector<16x256xbf16>
    %c0_1 = arith.constant 0 : index
    %c0_2 = arith.constant 0 : index
    %2 = vector.load %arg2[%c0_1, %c0_2] : memref<256x128xbf16, #tpu.memory_space<vmem>>, vector<256x128xbf16>
    %cst = arith.constant dense<0.000000e+00> : vector<16x128xf32>
    %3 = tpu.matmul %1, %2, %cst {dimension_numbers = #tpu.dot_dimension_numbers<[1], [0], [0], [1], [0, 0, 1, 1], [], []>} : vector<16x256xbf16>, vector<256x128xbf16>, vector<16x128xf32> -> vector<16x128xf32>
    %c0_3 = arith.constant 0 : index
    %c0_4 = arith.constant 0 : index
    %4 = vector.load %arg3[%c0_3, %c0_4] : memref<1x128xf32, #tpu.memory_space<vmem>>, vector<1x128xf32>
    %5 = vector.broadcast %4 : vector<1x128xf32> to vector<16x128xf32>
    %6 = arith.addf %3, %5 : vector<16x128xf32>
    %c0_5 = arith.constant 0 : index
    %c0_6 = arith.constant 0 : index
    %7 = vector.load %arg4[%c0_5, %c0_6] : memref<16x128xf32, #tpu.memory_space<vmem>>, vector<16x128xf32>
    tpu.vector_store %arg4[%c0_5, %c0_6], %6 {strides = array<i32>} : memref<16x128xf32, #tpu.memory_space<vmem>>, vector<16x128xf32>,
    return
  }
  func.func @transform_0(%arg0: i32) -> (i32, i32) {
    %c0_i32 = arith.constant 0 : i32
    %c0_i32_0 = arith.constant 0 : i32
    return %arg0, %c0_i32 : i32, i32
  }
  func.func @transform_1(%arg0: i32) -> (i32, i32) {
    %c0_i32 = arith.constant 0 : i32
    %c0_i32_0 = arith.constant 0 : i32
    %c0_i32_1 = arith.constant 0 : i32
    return %c0_i32, %c0_i32_0 : i32, i32
  }
  func.func @transform_2(%arg0: i32) -> (i32, i32) {
    %c0_i32 = arith.constant 0 : i32
    %c0_i32_0 = arith.constant 0 : i32
    %c0_i32_1 = arith.constant 0 : i32
    return %c0_i32, %c0_i32_0 : i32, i32
  }
  func.func @transform_3(%arg0: i32) -> (i32, i32) {
    %c0_i32 = arith.constant 0 : i32
    %c0_i32_0 = arith.constant 0 : i32
    return %arg0, %c0_i32 : i32, i32
  }
}

</mosaic_0001>

<llo_original>
// kernel: instance_decoder_forward.1
$region0: #{instance_decoder_forward.1}
  #allocation0 [shape = 'u32[]', space=smem, size = 0x4, offset = 0x4, fixed_abs, tag = 'smem constant byte address 0x4 - core index']
  #allocation1 [shape = 'u32[144,128]{1,0:T(1,128)}', space=vmem, size = 0x12000, scoped, tag = 'internal scratch']
  %s0 = inlined_call_operand.vmem [shape: f32[32,256], index: 0, kind: input, shape index: {}]
  %s1 = inlined_call_operand.vmem [shape: bf16[256,128], index: 1, kind: input, shape index: {}]
  %s2 = inlined_call_operand.vmem [shape: f32[1,128], index: 2, kind: input, shape index: {}]
  %s3 = inlined_call_operand.vmem [shape: f32[32,128], index: 3, kind: output, shape index: {}]
  %s4 = sld [smem:[#allocation0]]
  $region45: #{instance_decoder_forward.1} parent=0
    _
  %s6 = ssub.s32 1, %s4
  %s7 = scalar_select 0, %s6, %s4
  loop: start=0, step=1, limit=4
  $region2: #{instance_decoder_forward.1} parent=0 // loop_pre_header
    _
  $region3: #{instance_decoder_forward.1} parent=0 // loop_header
    %s9 = sphi 0, %s13
    %p10 = scmp.ge.s32.totalorder %s9, 4
    %s19 = sphi 0, %s21
    %s22 = sphi 0, %s19
    %s23 = sphi 0, %s22
    %s39 = sphi 0, %s23
    %s43 = sphi 0, %s43
    %s45 = sphi 0, %s43
    %s46 = sphi 0, %s45
    %s60 = sphi 0, %s46
    %s64 = sphi 0, %s64
    %s66 = sphi 0, %s64
    %s67 = sphi 0, %s66
    %s81 = sphi 0, %s67
    %s87 = sphi 0, %s89
    %s90 = sphi 0, %s87
    %s91 = sphi 0, %s90
    %s107 = sphi 0, %s91
  $region4: #{instance_decoder_forward.1} parent=0 // loop_header_branch
    %12 = sbr.rel (%p10) target = $region8
  $region5: #{instance_decoder_forward.1} parent=0 // loop_body
    %s14 = ssub.s32 %s9, 1
    %s15 = ssub.s32 %s9, 2
    %s16 = sadd.s32 %s9, 1
    %s17 = ssub.s32 %s9, %s16
    %p18 = scmp.eq.s32.totalorder %s17, 0
    %s20 = sadd.s32 %s19, 1
    %s21 = scalar_select %p18, %s19, %s20
    %p24 = pneg %p18
    %p25 = scmp.eq.s32.totalorder %s9, 1
    %p26 = por %p24, %p25
    %p27 = scmp.ne.s32.totalorder %s19, %s22
    %p28 = scmp.eq.s32.totalorder %s9, 0
    %p29 = por %p27, %p28
    %p30 = scmp.ne.s32.totalorder %s19, %s22
    %p31 = scmp.eq.s32.totalorder %s14, 1
    %p32 = por %p30, %p31
    %p33 = scmp.ne.s32.totalorder %s22, %s23
    %p34 = scmp.eq.s32.totalorder %s14, 0
    %p35 = por %p33, %p34
    %p36 = scmp.ne.s32.totalorder %s22, %s23
    %p37 = scmp.eq.s32.totalorder %s15, 1
    %p38 = por %p36, %p37
    %p40 = scmp.ne.s32.totalorder %s23, %s39
    %p41 = scmp.eq.s32.totalorder %s15, 0
    %p42 = por %p40, %p41
    %s44 = sadd.s32 %s43, 1
    %p47 = scmp.eq.s32.totalorder %s9, 1
    %p48 = scmp.ne.s32.totalorder %s43, %s45
    %p49 = scmp.eq.s32.totalorder %s9, 0
    %p50 = por %p48, %p49
    %p51 = scmp.ne.s32.totalorder %s43, %s45
    %p52 = scmp.eq.s32.totalorder %s14, 1
    %p53 = por %p51, %p52
    %p54 = scmp.ne.s32.totalorder %s45, %s46
    %p55 = scmp.eq.s32.totalorder %s14, 0
    %p56 = por %p54, %p55
    %p57 = scmp.ne.s32.totalorder %s45, %s46
    %p58 = scmp.eq.s32.totalorder %s15, 1
    %p59 = por %p57, %p58
    %p61 = scmp.ne.s32.totalorder %s46, %s60
    %p62 = scmp.eq.s32.totalorder %s15, 0
    %p63 = por %p61, %p62
    %s65 = sadd.s32 %s64, 1
    %p68 = scmp.eq.s32.totalorder %s9, 1
    %p69 = scmp.ne.s32.totalorder %s64, %s66
    %p70 = scmp.eq.s32.totalorder %s9, 0
    %p71 = por %p69, %p70
    %p72 = scmp.ne.s32.totalorder %s64, %s66
    %p73 = scmp.eq.s32.totalorder %s14, 1
    %p74 = por %p72, %p73
    %p75 = scmp.ne.s32.totalorder %s66, %s67
    %p76 = scmp.eq.s32.totalorder %s14, 0
    %p77 = por %p75, %p76
    %p78 = scmp.ne.s32.totalorder %s66, %s67
    %p79 = scmp.eq.s32.totalorder %s15, 1
    %p80 = por %p78, %p79
    %p82 = scmp.ne.s32.totalorder %s67, %s81
    %p83 = scmp.eq.s32.totalorder %s15, 0
    %p84 = por %p82, %p83
    %s85 = ssub.s32 %s9, %s16
    %p86 = scmp.eq.s32.totalorder %s85, 0
    %s88 = sadd.s32 %s87, 1
    %s89 = scalar_select %p86, %s87, %s88
    %p92 = pneg %p86
    %p93 = scmp.eq.s32.totalorder %s9, 1
    %p94 = por %p92, %p93
    %p95 = scmp.ne.s32.totalorder %s87, %s90
    %p96 = scmp.eq.s32.totalorder %s9, 0
    %p97 = por %p95, %p96
    %p98 = scmp.ne.s32.totalorder %s87, %s90
    %p99 = scmp.eq.s32.totalorder %s14, 1
    %p100 = por %p98, %p99
    %p101 = scmp.ne.s32.totalorder %s90, %s91
    %p102 = scmp.eq.s32.totalorder %s14, 0
    %p103 = por %p101, %p102
    %p104 = scmp.ne.s32.totalorder %s90, %s91
    %p105 = scmp.eq.s32.totalorder %s15, 1
    %p106 = por %p104, %p105
    %p108 = scmp.ne.s32.totalorder %s91, %s107
    %p109 = scmp.eq.s32.totalorder %s15, 0
    %p110 = por %p108, %p109
    %p111 = scmp.le.s32.totalorder 1, %s9
    %p112 = scmp.lt.s32.totalorder %s9, 3
    %p113 = pnand %p111, %p112
    %p114 = pneg %p113
    // Predicated region
    $region9: #{instance_decoder_forward.1} parent=5 // pred_check
      _
    $region10: #{instance_decoder_forward.1} parent=5 // pred_check_branch
      %116 = sbr.rel (%p113) target = $region12
    $region11: #{instance_decoder_forward.1} parent=5 // pred_region
      %s117 = ssub.s32 %s9, 1
      // Predicated region
      $region13: #{instance_decoder_forward.1} parent=11 // pred_check
        %p118 = pneg %p56
      $region14: #{instance_decoder_forward.1} parent=11 // pred_check_branch
        %120 = sbr.rel (%p118) target = $region16
      $region15: #{instance_decoder_forward.1} parent=11 // pred_region
        _
      $region16: #{instance_decoder_forward.1} parent=11 // pred_fallthru
        _
      // Predicated region
      $region17: #{instance_decoder_forward.1} parent=11 // pred_check
        %p121 = pneg %p77
      $region18: #{instance_decoder_forward.1} parent=11 // pred_check_branch
        %123 = sbr.rel (%p121) target = $region20
      $region19: #{instance_decoder_forward.1} parent=11 // pred_region
        _
      $region20: #{instance_decoder_forward.1} parent=11 // pred_fallthru
        _
    $region12: #{instance_decoder_forward.1} parent=5 // pred_fallthru
      _
    %p124 = scmp.lt.s32.totalorder %s9, 2
    // Predicated region
    $region21: #{instance_decoder_forward.1} parent=5 // pred_check
      %p125 = pneg %p124
    $region22: #{instance_decoder_forward.1} parent=5 // pred_check_branch
      %127 = sbr.rel (%p125) target = $region24
    $region23: #{instance_decoder_forward.1} parent=5 // pred_region
      // Predicated region
      $region25: #{instance_decoder_forward.1} parent=23 // pred_check
        %p128 = pneg %p29
      $region26: #{instance_decoder_forward.1} parent=23 // pred_check_branch
        %130 = sbr.rel (%p128) target = $region28
      $region27: #{instance_decoder_forward.1} parent=23 // pred_region
        %s131 = smul.u32 2, %s9
        %p132 = scmp.lt.s32.totalorder %s131, 3
        %s133 = scalar_select %p132, %s131, 3
        %s134 = smul.addr %s133, 2
        %s135 = smul.addr %s134, 8
        %s136 = scalar_lea.vmem %s0, %s135
        %s137 = smul.u32 2, %s9
      $region28: #{instance_decoder_forward.1} parent=23 // pred_fallthru
        _
    $region24: #{instance_decoder_forward.1} parent=5 // pred_fallthru
      _
    %p138 = scmp.le.s32.totalorder 1, %s9
    %p139 = scmp.lt.s32.totalorder %s9, 3
    %p140 = pnand %p138, %p139
    %p141 = pneg %p140
    // Predicated region
    $region29: #{instance_decoder_forward.1} parent=5 // pred_check
      _
    $region30: #{instance_decoder_forward.1} parent=5 // pred_check_branch
      %143 = sbr.rel (%p140) target = $region32
    $region31: #{instance_decoder_forward.1} parent=5 // pred_region
      %s144 = ssub.s32 %s9, 1
      %s145 = smul.u32 2, %s14
      %p146 = scmp.lt.s32.totalorder %s145, 3
      %s147 = scalar_select %p146, %s145, 3
      %s148 = smul.addr %s147, 2
      %s149 = smul.addr %s148, 8
      %s150 = scalar_lea.vmem %s0, %s149
      %p151 = pneg %p35
      %p152 = pneg %p32
      %p153 = pneg %p56
      %p154 = pneg %p53
      %p155 = pneg %p77
      %p156 = pneg %p74
      %p157 = pneg %p103
      %p158 = pneg %p100
      %s159 = smul.u32 2, %s14
      %p160 = scmp.lt.s32.totalorder %s159, 3
      %s161 = scalar_select %p160, %s159, 3
      %s162 = smul.addr %s161, 8
      %s163 = scalar_lea.vmem %s3, %s162
      %s164 = smul.u32 2, %s14
      %p165 = scmp.lt.s32.totalorder %s164, 3
      %s166 = scalar_select %p165, %s164, 3
      %s167 = smul.addr %s166, 2
      %s168 = smul.addr %s167, 8
      %s169 = scalar_lea.vmem %s0, %s168
      %s170 = smul.u32 2, %s14
      %s171 = smul.u32 2, %s14
      %p172 = scmp.lt.s32.totalorder %s171, 3
      %s173 = scalar_select %p172, %s171, 3
      %s174 = smul.addr %s173, 8
      %s175 = scalar_lea.vmem %s3, %s174
      %s176 = smul.u32 2, %s14
      %v178 = vld [vmem:[%s169] sm:$0xff]
      %v179 = vld [vmem:[%s169 + $0x8] sm:$0xff]
      %v180 = vld [vmem:[%s169 + $0x10] sm:$0xff]
      %v181 = vld [vmem:[%s169 + $0x18] sm:$0xff]
      %v182 = vpack.c.bf16 %v180, %v178
      %v183 = vpack.c.bf16 %v181, %v179
      %v184 = vld [vmem:[%s1] sm:$0xf]
      %v185 = vld [vmem:[%s1 + $0x4] sm:$0xf]
      %v186 = vld [vmem:[%s1 + $0x8] sm:$0xf]
      %v187 = vld [vmem:[%s1 + $0xc] sm:$0xf]
      %v188 = vld [vmem:[%s1 + $0x10] sm:$0xf]
      %v189 = vld [vmem:[%s1 + $0x14] sm:$0xf]
      %v190 = vld [vmem:[%s1 + $0x18] sm:$0xf]
      %v191 = vld [vmem:[%s1 + $0x1c] sm:$0xf]
      %v192 = vld [vmem:[%s1 + $0x20] sm:$0xf]
      %v193 = vld [vmem:[%s1 + $0x24] sm:$0xf]
      %v194 = vld [vmem:[%s1 + $0x28] sm:$0xf]
      %v195 = vld [vmem:[%s1 + $0x2c] sm:$0xf]
      %v196 = vld [vmem:[%s1 + $0x30] sm:$0xf]
      %v197 = vld [vmem:[%s1 + $0x34] sm:$0xf]
      %v198 = vld [vmem:[%s1 + $0x38] sm:$0xf]
      %v199 = vld [vmem:[%s1 + $0x3c] sm:$0xf]
      %v200 = vld [vmem:[%s1 + $0x40] sm:$0xf]
      %v201 = vld [vmem:[%s1 + $0x44] sm:$0xf]
      %v202 = vld [vmem:[%s1 + $0x48] sm:$0xf]
      %v203 = vld [vmem:[%s1 + $0x4c] sm:$0xf]
      %v204 = vld [vmem:[%s1 + $0x50] sm:$0xf]
      %v205 = vld [vmem:[%s1 + $0x54] sm:$0xf]
      %v206 = vld [vmem:[%s1 + $0x58] sm:$0xf]
      %v207 = vld [vmem:[%s1 + $0x5c] sm:$0xf]
      %v208 = vld [vmem:[%s1 + $0x60] sm:$0xf]
      %v209 = vld [vmem:[%s1 + $0x64] sm:$0xf]
      %v210 = vld [vmem:[%s1 + $0x68] sm:$0xf]
      %v211 = vld [vmem:[%s1 + $0x6c] sm:$0xf]
      %v212 = vld [vmem:[%s1 + $0x70] sm:$0xf]
      %v213 = vld [vmem:[%s1 + $0x74] sm:$0xf]
      %v214 = vld [vmem:[%s1 + $0x78] sm:$0xf]
      %v215 = vld [vmem:[%s1 + $0x7c] sm:$0xf]
      %v216 = vld [vmem:[%s2] sm:$0x1]
      %v218 = vlaneseq
      %v219 = vshrl.u32 %v218, 7
      %v220 = vsub.s32 0, %v219
      %v221 = vrot.slane %v216, %v220
      %v255 = vunpack.c.l.b16 %v184
      %v256 = vunpack.c.l.b16 %v185
      %v257 = vunpack.c.l.b16 %v186
      %v258 = vunpack.c.l.b16 %v187
      %v259 = vunpack.c.l.b16 %v188
      %v260 = vunpack.c.l.b16 %v189
      %v261 = vunpack.c.l.b16 %v190
      %v262 = vunpack.c.l.b16 %v191
      %v263 = vunpack.c.l.b16 %v192
      %v264 = vunpack.c.l.b16 %v193
      %v265 = vunpack.c.l.b16 %v194
      %v266 = vunpack.c.l.b16 %v195
      %v267 = vunpack.c.l.b16 %v196
      %v268 = vunpack.c.l.b16 %v197
      %v269 = vunpack.c.l.b16 %v198
      %v270 = vunpack.c.l.b16 %v199
      %v271 = vunpack.c.l.b16 %v200
      %v272 = vunpack.c.l.b16 %v201
      %v273 = vunpack.c.l.b16 %v202
      %v274 = vunpack.c.l.b16 %v203
      %v275 = vunpack.c.l.b16 %v204
      %v276 = vunpack.c.l.b16 %v205
      %v277 = vunpack.c.l.b16 %v206
      %v278 = vunpack.c.l.b16 %v207
      %v279 = vunpack.c.l.b16 %v208
      %v280 = vunpack.c.l.b16 %v209
      %v281 = vunpack.c.l.b16 %v210
      %v282 = vunpack.c.l.b16 %v211
      %v283 = vunpack.c.l.b16 %v212
      %v284 = vunpack.c.l.b16 %v213
      %v285 = vunpack.c.l.b16 %v214
      %v286 = vunpack.c.l.b16 %v215
      %v287 = vpack.c.b16 %v256, %v255
      %v288 = vpack.c.b16 %v258, %v257
      %v289 = vpack.c.b16 %v260, %v259
      %v290 = vpack.c.b16 %v262, %v261
      %v291 = vpack.c.b16 %v264, %v263
      %v292 = vpack.c.b16 %v266, %v265
      %v293 = vpack.c.b16 %v268, %v267
      %v294 = vpack.c.b16 %v270, %v269
      %v295 = vpack.c.b16 %v272, %v271
      %v296 = vpack.c.b16 %v274, %v273
      %v297 = vpack.c.b16 %v276, %v275
      %v298 = vpack.c.b16 %v278, %v277
      %v299 = vpack.c.b16 %v280, %v279
      %v300 = vpack.c.b16 %v282, %v281
      %v301 = vpack.c.b16 %v284, %v283
      %v302 = vpack.c.b16 %v286, %v285
      %319 = vmatprep.subr.bf16.mxu0 0
      %320 = vmatpush1.bf16.msra.mxu0 %v287
      %321 = vmatprep.subr.bf16.mxu0 0
      %322 = vmatpush1.bf16.msra.mxu0 %v288
      %323 = vmatprep.subr.bf16.mxu0 0
      %324 = vmatpush1.bf16.msra.mxu0 %v289
      %325 = vmatprep.subr.bf16.mxu0 0
      %326 = vmatpush1.bf16.msra.mxu0 %v290
      %327 = vmatprep.subr.bf16.mxu0 0
      %328 = vmatpush1.bf16.msra.mxu0 %v291
      %329 = vmatprep.subr.bf16.mxu0 0
      %330 = vmatpush1.bf16.msra.mxu0 %v292
      %331 = vmatprep.subr.bf16.mxu0 0
      %332 = vmatpush1.bf16.msra.mxu0 %v293
      %333 = vmatprep.subr.bf16.mxu0 0
      %334 = vmatpush1.bf16.msra.mxu0 %v294
      %335 = vmatprep.subr.bf16.mxu0 0
      %336 = vmatpush1.bf16.msra.mxu0 %v295
      %337 = vmatprep.subr.bf16.mxu0 0
      %338 = vmatpush1.bf16.msra.mxu0 %v296
      %339 = vmatprep.subr.bf16.mxu0 0
      %340 = vmatpush1.bf16.msra.mxu0 %v297
      %341 = vmatprep.subr.bf16.mxu0 0
      %342 = vmatpush1.bf16.msra.mxu0 %v298
      %343 = vmatprep.subr.bf16.mxu0 0
      %344 = vmatpush1.bf16.msra.mxu0 %v299
      %345 = vmatprep.subr.bf16.mxu0 0
      %346 = vmatpush1.bf16.msra.mxu0 %v300
      %347 = vmatprep.subr.bf16.mxu0 0
      %348 = vmatpush1.bf16.msra.mxu0 %v301
      %349 = vmatprep.subr.bf16.mxu0 0
      %350 = vmatpush1.bf16.msra.mxu0 %v302
      %351 = vmatprep.mubr.bf16.mxu0 %v183
      %352 = vmatmul.mubr.bf16.gmra.mrb[0].mxu0 %v182
      %v353 = vpop.f32.mrb[0].mxu0
      %v354 = vadd.f32 %v221, %v353
      %v355 = vpop.f32.mrb[0].mxu0
      %v356 = vpop.f32.mrb[0].mxu0
      %v357 = vadd.f32 %v221, %v356
      %v358 = vpop.f32.mrb[0].mxu0
      %359 = vdwg.mxu0
      %360 = vst [vmem:[%s175] sm:$0xff] %v354
      %361 = vst [vmem:[%s175 + $0x8] sm:$0xff] %v357
      %s362 = smul.u32 2, %s14
      %p363 = scmp.lt.s32.totalorder %s362, 3
      %s364 = scalar_select %p363, %s362, 3
      %s365 = smul.addr %s364, 8
      %s366 = scalar_lea.vmem %s3, %s365
      // Predicated region
      $region33: #{instance_decoder_forward.1} parent=31 // pred_check
        %p367 = pneg %p100
      $region34: #{instance_decoder_forward.1} parent=31 // pred_check_branch
        %369 = sbr.rel (%p367) target = $region36
      $region35: #{instance_decoder_forward.1} parent=31 // pred_region
        %s370 = smul.u32 2, %s14
      $region36: #{instance_decoder_forward.1} parent=31 // pred_fallthru
        _
    $region32: #{instance_decoder_forward.1} parent=5 // pred_fallthru
      _
    %p371 = scmp.le.s32.totalorder 2, %s9
    // Predicated region
    $region37: #{instance_decoder_forward.1} parent=5 // pred_check
      %p372 = pneg %p371
    $region38: #{instance_decoder_forward.1} parent=5 // pred_check_branch
      %374 = sbr.rel (%p372) target = $region40
    $region39: #{instance_decoder_forward.1} parent=5 // pred_region
      %s375 = ssub.s32 %s9, 2
      // Predicated region
      $region41: #{instance_decoder_forward.1} parent=39 // pred_check
        %p376 = pneg %p106
      $region42: #{instance_decoder_forward.1} parent=39 // pred_check_branch
        %378 = sbr.rel (%p376) target = $region44
      $region43: #{instance_decoder_forward.1} parent=39 // pred_region
        %s379 = smul.u32 2, %s15
        %p380 = scmp.lt.s32.totalorder %s379, 3
        %s381 = scalar_select %p380, %s379, 3
        %s382 = smul.addr %s381, 8
        %s383 = scalar_lea.vmem %s3, %s382
      $region44: #{instance_decoder_forward.1} parent=39 // pred_fallthru
        _
    $region40: #{instance_decoder_forward.1} parent=5 // pred_fallthru
      _
  $region6: #{instance_decoder_forward.1} parent=0 // loop_footer
    %s13 = sadd.s32 1, %s9
  $region7: #{instance_decoder_forward.1} parent=0 // loop_footer_branch
    %8 = sbr.rel target = $region3
  $region8: #{instance_decoder_forward.1} parent=0 // loop_exit
    _

</llo_original>
